<compile_context>
chip_gen: v6e
topology: v6e:2x2x1
jax: 0.10.0
libtpu: 0.0.40
codegen_flags: <defaults>
</compile_context>

<pallas_src>
import functools
import math

import jax
import jax.numpy as jnp
from jax.experimental import pallas as pl
from jax.experimental.pallas import tpu as pltpu

_LANE = 128
_TARGET_BLOCK_BYTES = 6 * 1024 * 1024   # ~6 MiB padded bytes per block buffer
_VMEM_LIMIT_BYTES = 48 * 1024 * 1024    # double-buffered in+out fits all chips
_MIN_GRID_STEPS = 4                     # give v7x's two TCs work to share


def _react_kernel(c_ref, x_ref, o_ref):
    # c lives in SMEM; changing the threshold never retraces or recompiles.
    c = c_ref[0, 0].astype(x_ref.dtype)
    o_ref[...] = jnp.minimum(x_ref[...], c)


def _round_up(v, m):
    return ((v + m - 1) // m) * m


def _round_down(v, m):
    return (v // m) * m


def _sublane_multiple(itemsize):
    # vreg (8,128) tiling: sub-32-bit dtypes pack along sublanes.
    return 8 * max(1, 4 // itemsize)


def _pick_block(extent, bytes_per_unit, target_bytes, multiple):
    """Largest block (a multiple of `multiple`) whose padded size stays under
    target_bytes, but small enough that the grid keeps >= _MIN_GRID_STEPS steps
    when the extent allows it."""
    cap = max(multiple, _round_down(max(target_bytes // bytes_per_unit, 1), multiple))
    want = _round_up(max(1, -(-extent // _MIN_GRID_STEPS)), multiple)
    return max(1, min(cap, want, extent))


@functools.partial(jax.jit, static_argnames=("target_block_bytes",))
def react(x: jax.Array, c=1.0, *, target_block_bytes: int = _TARGET_BLOCK_BYTES) -> jax.Array:
    """Elementwise clip(max=c): out = min(x, c), matching torch.Tensor.clip(max=c).

    Intended for floating dtypes (conv activations).
    """
    dtype = x.dtype
    # TODO(synk): integer dtypes need explicit promotion rules to match torch.clip.
    if x.ndim <= 1:
        # 0-D / 1-D inputs: trivial, not worth a kernel launch.
        return jnp.minimum(x, jnp.asarray(c, dtype))

    itemsize = jnp.dtype(dtype).itemsize
    sub = _sublane_multiple(itemsize)
    c_arr = jnp.asarray(c, jnp.float32).reshape((1, 1))
    c_spec = pl.BlockSpec(memory_space=pltpu.MemorySpace.SMEM)

    orig_shape = x.shape
    h, w = orig_shape[-2], orig_shape[-1]
    w_bytes = _round_up(w, _LANE) * itemsize        # lane-padded bytes of one row
    slice_bytes = _round_up(h, sub) * w_bytes       # padded bytes of one (h, w) slice

    cost = pl.CostEstimate(flops=x.size, transcendentals=0,
                           bytes_accessed=2 * x.size * itemsize)

    if x.ndim >= 3:
        # Collapse leading dims only (free: trailing, TPU-tiled dims unchanged).
        lead = math.prod(orig_shape[:-2])
        x3 = x.reshape(lead, h, w)
        if slice_bytes <= target_block_bytes:
            th = h
            tb = _pick_block(lead, slice_bytes, target_block_bytes, 1)
        else:
            # One (h, w) slice is already larger than a block: tile h instead.
            # TODO(synk): extremely wide last dims (w_bytes > target) would also
            # need lane-dim blocking; not needed for conv activations.
            tb = 1
            th = _pick_block(h, w_bytes, target_block_bytes, sub)
        grid = (pl.cdiv(lead, tb), pl.cdiv(h, th))
        spec = pl.BlockSpec((tb, th, w), lambda i, j: (i, j, 0))
        out = pl.pallas_call(
            _react_kernel,
            out_shape=jax.ShapeDtypeStruct((lead, h, w), dtype),
            grid_spec=pltpu.PrefetchScalarGridSpec(
                num_scalar_prefetch=0,
                grid=grid,
                in_specs=[c_spec, spec],
                out_specs=spec,
            ),
            compiler_params=pltpu.CompilerParams(
                dimension_semantics=("parallel", "parallel"),
                vmem_limit_bytes=_VMEM_LIMIT_BYTES,
            ),
            cost_estimate=cost,
        )(c_arr, x3)
        return out.reshape(orig_shape)

    # ndim == 2: block over rows, keep the full lane dim.
    rows, cols = orig_shape
    tr = _pick_block(rows, w_bytes, target_block_bytes, sub)
    grid = (pl.cdiv(rows, tr),)
    spec = pl.BlockSpec((tr, cols), lambda i: (i, 0))
    return pl.pallas_call(
        _react_kernel,
        out_shape=jax.ShapeDtypeStruct((rows, cols), dtype),
        grid_spec=pltpu.PrefetchScalarGridSpec(
            num_scalar_prefetch=0,
            grid=grid,
            in_specs=[c_spec, spec],
            out_specs=spec,
        ),
        compiler_params=pltpu.CompilerParams(
            dimension_semantics=("parallel",),
            vmem_limit_bytes=_VMEM_LIMIT_BYTES,
        ),
        cost_estimate=cost,
    )(c_arr, x)


if __name__ == "__main__":
    key = jax.random.PRNGKey(0)
    # Small NCHW input consistent with a conv-net activation: [2, 4, 16, 16].
    x = jax.random.normal(key, (2, 4, 16, 16), dtype=jnp.float32) * 3.0

    c = 1.0
    y = jax.block_until_ready(react(x, c))

    # Reference check against plain JAX (torch clip(max=c) == minimum(x, c)).
    y_ref = jnp.minimum(x, c)
    assert y.shape == x.shape and y.dtype == x.dtype
    assert bool(jnp.allclose(y, y_ref)), "mismatch vs reference"

    # Sweep c without retracing (c is an SMEM runtime input, not static).
    y2 = jax.block_until_ready(react(x, 0.25))
    assert bool(jnp.allclose(y2, jnp.minimum(x, 0.25))), "mismatch vs reference (c=0.25)"

    print("KERNEL_OK")
</pallas_src>

<mosaic_0001>
module attributes {stable_mosaic.version = 11 : i64} {
  func.func @_react_kernel(%arg0: i32, %arg1: i32, %arg2: memref<1x1xf32, #tpu.memory_space<smem>>, %arg3: memref<2x16x16xf32, #tpu.memory_space<vmem>>, %arg4: memref<2x16x16xf32, #tpu.memory_space<vmem>>) attributes {dimension_semantics = [#tpu.dimension_semantics<parallel>, #tpu.dimension_semantics<parallel>], iteration_bounds = array<i64: 4, 1>, scalar_prefetch = 0 : i64, scratch_operands = 0 : i64, tpu.core_type = #tpu.core_type<tc>, window_params = [{transform_indices = @transform_0, window_bounds = array<i64: 1, 1>}, {transform_indices = @transform_1, window_bounds = array<i64: 2, 16, 16>}, {transform_indices = @transform_2, window_bounds = array<i64: 2, 16, 16>}]} {
    %c0 = arith.constant 0 : index
    %c0_0 = arith.constant 0 : index
    %0 = memref.load %arg2[%c0, %c0_0] : memref<1x1xf32, #tpu.memory_space<smem>>
    %c0_1 = arith.constant 0 : index
    %c0_2 = arith.constant 0 : index
    %c0_3 = arith.constant 0 : index
    %1 = vector.load %arg3[%c0_1, %c0_2, %c0_3] : memref<2x16x16xf32, #tpu.memory_space<vmem>>, vector<2x16x16xf32>
    %2 = vector.broadcast %0 : f32 to vector<2x16x16xf32>
    %3 = arith.minimumf %1, %2 : vector<2x16x16xf32>
    %c0_4 = arith.constant 0 : index
    %c0_5 = arith.constant 0 : index
    %c0_6 = arith.constant 0 : index
    %4 = vector.load %arg4[%c0_4, %c0_5, %c0_6] : memref<2x16x16xf32, #tpu.memory_space<vmem>>, vector<2x16x16xf32>
    tpu.vector_store %arg4[%c0_4, %c0_5, %c0_6], %3 {strides = array<i32>} : memref<2x16x16xf32, #tpu.memory_space<vmem>>, vector<2x16x16xf32>,
    return
  }
  func.func @transform_0(%arg0: i32, %arg1: i32) -> (i32, i32) {
    %c0_i32 = arith.constant 0 : i32
    %c0_i32_0 = arith.constant 0 : i32
    %c0_i32_1 = arith.constant 0 : i32
    return %c0_i32, %c0_i32_0 : i32, i32
  }
  func.func @transform_1(%arg0: i32, %arg1: i32) -> (i32, i32, i32) {
    %c0_i32 = arith.constant 0 : i32
    %c0_i32_0 = arith.constant 0 : i32
    return %arg0, %arg1, %c0_i32 : i32, i32, i32
  }
  func.func @transform_2(%arg0: i32, %arg1: i32) -> (i32, i32, i32) {
    %c0_i32 = arith.constant 0 : i32
    %c0_i32_0 = arith.constant 0 : i32
    return %arg0, %arg1, %c0_i32 : i32, i32, i32
  }
}

</mosaic_0001>

<llo_original>
// kernel: react.1
$region0: #{react.1}
  #allocation0 [shape = 'u32[]', space=smem, size = 0x4, offset = 0x4, fixed_abs, tag = 'smem constant byte address 0x4 - core index']
  #allocation1 [shape = 'u32[144,128]{1,0:T(1,128)}', space=vmem, size = 0x12000, scoped, tag = 'internal scratch']
  #allocation2 [shape = 'f32[1,1]{1,0:T(1,128)S(6)}', space=smem, size = 0x200, scoped, tag = 'scoped memory for react.1']
  %s0 = inlined_call_operand.<no memory space> [shape: f32[1,1], index: 0, kind: input, shape index: {}]
  %s1 = inlined_call_operand.hbm [shape: f32[8,16,16], index: 1, kind: input, shape index: {}]
  %s2 = inlined_call_operand.hbm [shape: f32[8,16,16], index: 2, kind: output, shape index: {}]
  %s3 = sld [smem:[#allocation0]]
  $region45: #{react.1} parent=0
    _
  %s5 = ssub.s32 1, %s3
  %s6 = scalar_select 0, %s5, %s3
  %7 = sst [smem:[#allocation2]] %s0
  $region1: #{react.1} parent=0
    #allocation3 [shape = 'u8[32768]{0}', space=vmem, size = 0x8000, scoped, tag = 'input window, operand 1']
    #allocation4 [shape = 's32[2]{0}', space=sflag, size = 0x8, scoped, tag = 'scoped memory for react.1']
    #allocation5 [shape = 's32[2]{0}', space=sflag, size = 0x8, scoped, tag = 'scoped memory for react.1']
    #allocation6 [shape = 'u8[32768]{0}', space=vmem, size = 0x8000, scoped, tag = 'output window, operand 0']
    %8 = vsyncpa [#allocation4], 0
    %s9 = scalar_lea.sflag [#allocation4], 1
    %10 = vsyncpa %s9, 0
    %11 = vsyncpa [#allocation5], 0
    %s12 = scalar_lea.sflag [#allocation5], 1
    %13 = vsyncpa %s12, 0
    loop: start=0, step=1, limit=6
    $region2: #{react.1} parent=1 // loop_pre_header
      _
    $region3: #{react.1} parent=1 // loop_header
      %s15 = sphi 0, %s19
      %p16 = scmp.ge.s32.totalorder %s15, 6
      %s22 = sphi 0, %s34
      %s23 = sphi 0, %s30
      %s24 = sphi 0, %s22
      %s25 = sphi 0, %s23
      %s26 = sphi 0, %s24
      %s27 = sphi 0, %s25
      %s35 = sphi 0, %s35
      %s37 = sphi 0, %s35
      %s38 = sphi 0, %s37
      %s52 = sphi 0, %s38
      %s60 = sphi 0, %s62
      %s63 = sphi 0, %s60
      %s64 = sphi 0, %s63
      %s80 = sphi 0, %s64
      %s88 = sphi 0, %s90
      %s91 = sphi 0, %s88
      %s92 = sphi 0, %s91
      %s108 = sphi 0, %s92
    $region4: #{react.1} parent=1 // loop_header_branch
      %18 = sbr.rel (%p16) target = $region8
    $region5: #{react.1} parent=1 // loop_body
      %s20 = ssub.s32 %s15, 1
      %s21 = ssub.s32 %s15, 2
      %s28 = sadd.s32 1, %s23
      %p29 = scmp.ge.s32.totalorder %s28, 1
      %s30 = scalar_select %p29, 0, %s28
      %s31 = sadd.s32 1, %s22
      %s32 = scalar_select %p29, %s31, %s22
      %p33 = scmp.ge.s32.totalorder %s32, 4
      %s34 = scalar_select %p33, 0, %s32
      %s36 = sadd.s32 %s35, 1
      %p39 = scmp.eq.s32.totalorder %s15, 3
      %p40 = scmp.ne.s32.totalorder %s35, %s37
      %p41 = scmp.eq.s32.totalorder %s15, 0
      %p42 = por %p40, %p41
      %p43 = scmp.ne.s32.totalorder %s35, %s37
      %p44 = scmp.eq.s32.totalorder %s20, 3
      %p45 = por %p43, %p44
      %p46 = scmp.ne.s32.totalorder %s37, %s38
      %p47 = scmp.eq.s32.totalorder %s20, 0
      %p48 = por %p46, %p47
      %p49 = scmp.ne.s32.totalorder %s37, %s38
      %p50 = scmp.eq.s32.totalorder %s21, 3
      %p51 = por %p49, %p50
      %p53 = scmp.ne.s32.totalorder %s38, %s52
      %p54 = scmp.eq.s32.totalorder %s21, 0
      %p55 = por %p53, %p54
      %s56 = ssub.s32 %s22, %s34
      %s57 = ssub.s32 %s23, %s30
      %s58 = sor.u32 %s56, %s57
      %p59 = scmp.eq.s32.totalorder %s58, 0
      %s61 = sadd.s32 %s60, 1
      %s62 = scalar_select %p59, %s60, %s61
      %p65 = pneg %p59
      %p66 = scmp.eq.s32.totalorder %s15, 3
      %p67 = por %p65, %p66
      %p68 = scmp.ne.s32.totalorder %s60, %s63
      %p69 = scmp.eq.s32.totalorder %s15, 0
      %p70 = por %p68, %p69
      %p71 = scmp.ne.s32.totalorder %s60, %s63
      %p72 = scmp.eq.s32.totalorder %s20, 3
      %p73 = por %p71, %p72
      %p74 = scmp.ne.s32.totalorder %s63, %s64
      %p75 = scmp.eq.s32.totalorder %s20, 0
      %p76 = por %p74, %p75
      %p77 = scmp.ne.s32.totalorder %s63, %s64
      %p78 = scmp.eq.s32.totalorder %s21, 3
      %p79 = por %p77, %p78
      %p81 = scmp.ne.s32.totalorder %s64, %s80
      %p82 = scmp.eq.s32.totalorder %s21, 0
      %p83 = por %p81, %p82
      %s84 = ssub.s32 %s22, %s34
      %s85 = ssub.s32 %s23, %s30
      %s86 = sor.u32 %s84, %s85
      %p87 = scmp.eq.s32.totalorder %s86, 0
      %s89 = sadd.s32 %s88, 1
      %s90 = scalar_select %p87, %s88, %s89
      %p93 = pneg %p87
      %p94 = scmp.eq.s32.totalorder %s15, 3
      %p95 = por %p93, %p94
      %p96 = scmp.ne.s32.totalorder %s88, %s91
      %p97 = scmp.eq.s32.totalorder %s15, 0
      %p98 = por %p96, %p97
      %p99 = scmp.ne.s32.totalorder %s88, %s91
      %p100 = scmp.eq.s32.totalorder %s20, 3
      %p101 = por %p99, %p100
      %p102 = scmp.ne.s32.totalorder %s91, %s92
      %p103 = scmp.eq.s32.totalorder %s20, 0
      %p104 = por %p102, %p103
      %p105 = scmp.ne.s32.totalorder %s91, %s92
      %p106 = scmp.eq.s32.totalorder %s21, 3
      %p107 = por %p105, %p106
      %p109 = scmp.ne.s32.totalorder %s92, %s108
      %p110 = scmp.eq.s32.totalorder %s21, 0
      %p111 = por %p109, %p110
      %p112 = scmp.le.s32.totalorder 1, %s15
      %p113 = scmp.lt.s32.totalorder %s15, 5
      %p114 = pnand %p112, %p113
      %p115 = pneg %p114
      // Predicated region
      $region9: #{react.1} parent=5 // pred_check
        _
      $region10: #{react.1} parent=5 // pred_check_branch
        %117 = sbr.rel (%p114) target = $region12
      $region11: #{react.1} parent=5 // pred_region
        %s118 = ssub.s32 %s15, 1
        // Predicated region
        $region13: #{react.1} parent=11 // pred_check
          %p119 = pneg %p48
        $region14: #{react.1} parent=11 // pred_check_branch
          %121 = sbr.rel (%p119) target = $region16
        $region15: #{react.1} parent=11 // pred_region
          _
        $region16: #{react.1} parent=11 // pred_fallthru
          _
      $region12: #{react.1} parent=5 // pred_fallthru
        _
      %p122 = scmp.lt.s32.totalorder %s15, 4
      // Predicated region
      $region17: #{react.1} parent=5 // pred_check
        %p123 = pneg %p122
      $region18: #{react.1} parent=5 // pred_check_branch
        %125 = sbr.rel (%p123) target = $region20
      $region19: #{react.1} parent=5 // pred_region
        // Predicated region
        $region21: #{react.1} parent=19 // pred_check
          %p126 = pneg %p70
        $region22: #{react.1} parent=19 // pred_check_branch
          %128 = sbr.rel (%p126) target = $region24
        $region23: #{react.1} parent=19 // pred_region
          %s129 = sand.u32 %s60, 1
          %s130 = scalar_lea.sflag [#allocation4], %s129
          %s131 = sand.u32 %s60, 1
          %s132 = smul.addr %s131, 32
          %s133 = scalar_lea.vmem [#allocation3], %s132
          %s134 = smul.u32 2, %s22
          %s135 = smul.u32 2, %s23
          %s137 = ssub.s32 512, 512
          %138 = vsyncadd %s130, %s137
          %s139 = smul.addr %s134, 2
          %s140 = sadd.s32 %s135, %s139
          %s141 = smul.addr %s140, 128
          %s142 = scalar_lea.hbm %s1, %s141
          %s143 = sshll.u32 %s133, 4
          %s144 = int_to_ptr.vmem [resolvable:$true] %s143
          %149 = dma.hbm_to_vmem [thread:$0]  %s142, 512, %s144, %s130, 128, 128, 8
        $region24: #{react.1} parent=19 // pred_fallthru
          _
      $region20: #{react.1} parent=5 // pred_fallthru
        _
      %p150 = scmp.le.s32.totalorder 1, %s15
      %p151 = scmp.lt.s32.totalorder %s15, 5
      %p152 = pnand %p150, %p151
      %p153 = pneg %p152
      // Predicated region
      $region25: #{react.1} parent=5 // pred_check
        _
      $region26: #{react.1} parent=5 // pred_check_branch
        %155 = sbr.rel (%p152) target = $region28
      $region27: #{react.1} parent=5 // pred_region
        %s156 = ssub.s32 %s15, 1
        %s157 = sand.u32 %s63, 1
        %s158 = scalar_lea.sflag [#allocation4], %s157
        %s159 = sand.u32 %s63, 1
        %s160 = smul.addr %s159, 32
        %s161 = scalar_lea.vmem [#allocation3], %s160
        // Predicated region
        $region29: #{react.1} parent=27 // pred_check
          %p162 = pneg %p76
        $region30: #{react.1} parent=27 // pred_check_branch
          %164 = sbr.rel (%p162) target = $region32
        $region31: #{react.1} parent=27 // pred_region
          %165 = dma.done %s158, 512
        $region32: #{react.1} parent=27 // pred_fallthru
          _
        %p166 = pneg %p48
        %p167 = pneg %p45
        %s168 = sand.u32 %s63, 1
        %s169 = scalar_lea.sflag [#allocation4], %s168
        %s170 = sand.u32 %s63, 1
        %s171 = smul.addr %s170, 32
        %s172 = scalar_lea.vmem [#allocation3], %s171
        %p173 = pneg %p76
        %p174 = pneg %p73
        %p175 = pneg %p104
        %p176 = pneg %p101
        %s177 = sand.u32 %s91, 1
        %s178 = scalar_lea.sflag [#allocation5], %s177
        %s179 = sand.u32 %s91, 1
        %s180 = smul.addr %s179, 32
        %s181 = scalar_lea.vmem [#allocation6], %s180
        %s182 = smul.u32 2, %s24
        %s183 = smul.u32 2, %s25
        %s184 = smul.u32 2, %s24
        %s185 = smul.u32 2, %s25
        %s186 = sld [smem:[#allocation2]]
        %v187 = vld [vmem:[%s161] sm:$0xff]
        %v188 = vld [vmem:[%s161 + $0x8] sm:$0xff]
        %v189 = vld [vmem:[%s161 + $0x10] sm:$0xff]
        %v190 = vld [vmem:[%s161 + $0x18] sm:$0xff]
        %v191 = vstv %s186
        %v192 = vmin.f32 %v187, %v191
        %v193 = vmin.f32 %v188, %v191
        %v194 = vmin.f32 %v189, %v191
        %v195 = vmin.f32 %v190, %v191
        %vm196 = vcmask 130048
        %197 = vst.msk [vmem:[%s181] sm:$0xff] %vm196, %v192
        %198 = vst.msk [vmem:[%s181 + $0x8] sm:$0xff] %vm196, %v193
        %199 = vst.msk [vmem:[%s181 + $0x10] sm:$0xff] %vm196, %v194
        %200 = vst.msk [vmem:[%s181 + $0x18] sm:$0xff] %vm196, %v195
        %s201 = sand.u32 %s91, 1
        %s202 = scalar_lea.sflag [#allocation5], %s201
        %s203 = sand.u32 %s91, 1
        %s204 = smul.addr %s203, 32
        %s205 = scalar_lea.vmem [#allocation6], %s204
        // Predicated region
        $region33: #{react.1} parent=27 // pred_check
          %p206 = pneg %p101
        $region34: #{react.1} parent=27 // pred_check_branch
          %208 = sbr.rel (%p206) target = $region36
        $region35: #{react.1} parent=27 // pred_region
          %s209 = smul.u32 2, %s24
          %s210 = smul.u32 2, %s25
          %s212 = ssub.s32 512, 512
          %213 = vsyncadd %s202, %s212
          %s214 = smul.addr %s209, 2
          %s215 = sadd.s32 %s210, %s214
          %s216 = smul.addr %s215, 128
          %s217 = scalar_lea.hbm %s2, %s216
          %s218 = sshll.u32 %s205, 4
          %s219 = int_to_ptr.vmem [resolvable:$true] %s218
          %224 = dma.vmem_to_hbm [thread:$0]  %s219, 512, %s217, %s202, 128, 128, 8
        $region36: #{react.1} parent=27 // pred_fallthru
          _
      $region28: #{react.1} parent=5 // pred_fallthru
        _
      %p225 = scmp.le.s32.totalorder 2, %s15
      // Predicated region
      $region37: #{react.1} parent=5 // pred_check
        %p226 = pneg %p225
      $region38: #{react.1} parent=5 // pred_check_branch
        %228 = sbr.rel (%p226) target = $region40
      $region39: #{react.1} parent=5 // pred_region
        %s229 = ssub.s32 %s15, 2
        // Predicated region
        $region41: #{react.1} parent=39 // pred_check
          %p230 = pneg %p107
        $region42: #{react.1} parent=39 // pred_check_branch
          %232 = sbr.rel (%p230) target = $region44
        $region43: #{react.1} parent=39 // pred_region
          %s233 = sand.u32 %s92, 1
          %s234 = scalar_lea.sflag [#allocation5], %s233
          %s235 = sand.u32 %s92, 1
          %s236 = smul.addr %s235, 32
          %s237 = scalar_lea.vmem [#allocation6], %s236
          %238 = dma.done %s234, 512
        $region44: #{react.1} parent=39 // pred_fallthru
          _
      $region40: #{react.1} parent=5 // pred_fallthru
        _
    $region6: #{react.1} parent=1 // loop_footer
      %s19 = sadd.s32 1, %s15
    $region7: #{react.1} parent=1 // loop_footer_branch
      %14 = sbr.rel target = $region3
    $region8: #{react.1} parent=1 // loop_exit
      _
    %239 = vsyncpa [#allocation4], 1
    %s240 = scalar_lea.sflag [#allocation4], 1
    %241 = vsyncpa %s240, 1
    %242 = vsyncpa [#allocation5], 1
    %s243 = scalar_lea.sflag [#allocation5], 1
    %244 = vsyncpa %s243, 1

</llo_original>
